<compile_context>
chip_gen: v6e
topology: v6e:2x2x1
jax: 0.10.0
libtpu: 0.0.40
codegen_flags: <defaults>
</compile_context>

<pallas_src>
from functools import partial

import jax
import jax.numpy as jnp
from jax.experimental import pallas as pl
from jax.experimental.pallas import tpu as pltpu


def _round_up(x, m):
    return ((x + m - 1) // m) * m


def _adm_kernel(act_ref, enc_ref, w_ref, b_ref, next_ref, rew_ref, *, A):
    """Packed-layout kernel.

    act_ref : (P, 8)      int32   actions, lane-major (8 rows per packed row)
    enc_ref : (P, 8*E)    f32/bf16 packed encodings
    w_ref   : (8*E, 8*Wp) fused head weights, 8x block-diagonal, Wp = pad128(A*E+A)
    b_ref   : (1, 8*Wp)   fused bias (f32)
    next_ref: (P, 8*E)    packed selected transitions
    rew_ref : (P, 8)      packed selected rewards
    """
    S = 8                                     # rows packed per output row
    P, lanes = enc_ref.shape
    E = lanes // S
    Wp = w_ref.shape[1] // S                  # lane-aligned per-sub-row segment width

    # One MXU dot covers all 8 packed sub-rows:
    #   full[p, s*Wp + j] == fused_head(enc[8p+s])[j]
    full = jnp.dot(enc_ref[...], w_ref[...], preferred_element_type=jnp.float32)
    full = full + b_ref[...]                  # (P, S*Wp) f32

    acts = act_ref[...]                       # (P, S) int32

    # lane -> owning action within one Wp-wide segment:
    #   [0, A*E)        : transition block of action lane//E
    #   [A*E, A*E + A)  : reward column of action lane - A*E
    #   [A*E + A, Wp)   : zero padding (maps to >= A, never selected)
    lane = jax.lax.broadcasted_iota(jnp.int32, (1, Wp), 1)
    lane_action = lane - A * E
    for a in range(A):                        # avoids integer division; A is tiny
        lane_action = jnp.where((lane >= a * E) & (lane < (a + 1) * E), a, lane_action)

    for s in range(S):                        # static unroll (8 iterations)
        a_s = acts[:, s:s + 1]                                        # (P, 1)
        seg = full[:, s * Wp:(s + 1) * Wp]                            # (P, Wp) tile-aligned
        masked = jnp.where(lane_action == a_s, seg, 0.0)              # (P, Wp)
        nxt = masked[:, 0:E]
        for a in range(1, A):
            nxt = nxt + masked[:, a * E:(a + 1) * E]                  # (P, E)
        rew = jnp.sum(masked[:, A * E:A * E + A], axis=-1, keepdims=True)  # (P, 1)
        next_ref[:, s * E:(s + 1) * E] = nxt.astype(next_ref.dtype)
        rew_ref[:, s:s + 1] = rew.astype(rew_ref.dtype)


def fuse_params(wt, bt, wr, br, *, dtype=jnp.float32):
    """Fuse the two linear heads and replicate block-diagonally 8x.

    Call ONCE per parameter set (hoisted out of the per-forward path).
    wt: (E, A*E), bt: (A*E,), wr: (E, A), br: (A,)  -- weights already (in, out).
    dtype=jnp.bfloat16 halves the weight + encoding HBM reads (MXU is bf16
    native on v5e/v6e/v7x; accumulation stays f32).
    """
    E = wt.shape[0]
    A = wr.shape[1]
    W = A * E + A
    Wp = 128 * ((W + 127) // 128)             # lane-align each packed segment
    assert wt.shape == (E, A * E) and bt.shape == (A * E,)
    assert wr.shape == (E, A) and br.shape == (A,)
    w = jnp.concatenate([wt, wr], axis=1)     # (E, W)
    w = jnp.pad(w, ((0, 0), (0, Wp - W)))     # (E, Wp)
    b = jnp.pad(jnp.concatenate([bt, br]), (0, Wp - W))
    w_big = jnp.kron(jnp.eye(8, dtype=w.dtype), w).astype(dtype)      # (8E, 8*Wp)
    b_big = jnp.tile(b, 8).reshape(1, 8 * Wp).astype(jnp.float32)     # (1, 8*Wp)
    return w_big, b_big


@partial(jax.jit, static_argnames=("num_actions", "block_b"))
def action_dynamic_model_forward(encoding, actions, w_big, b_big, *,
                                 num_actions, block_b=2048):
    """encoding: (B, E); actions: (B,) int; (w_big, b_big) from fuse_params."""
    B, E = encoding.shape
    A = num_actions
    Wp = 128 * ((A * E + A + 127) // 128)
    assert w_big.shape == (8 * E, 8 * Wp) and b_big.shape == (1, 8 * Wp)

    # Batch tile (rows): multiple of 64 so the packed sublane dim (tb//8) is a
    # multiple of 8.  Keep >= 2 grid steps when the batch allows it so v7x's two
    # TensorCores both get work via the "parallel" axis; default 2048 rows/step
    # keeps VMEM well under the v5e 16 MiB scoped default while amortizing the
    # ~0.35 us per-grid-step overhead.
    if B > 64:
        tb = min(block_b, _round_up(pl.cdiv(B, 2), 64))
    else:
        tb = 64
    tb = max(64, (tb // 64) * 64)
    n_blocks = pl.cdiv(B, tb)
    tb = _round_up(pl.cdiv(B, n_blocks), 64)  # balance blocks, minimize padding
    n_blocks = pl.cdiv(B, tb)
    Bp = n_blocks * tb

    enc = encoding.astype(w_big.dtype)
    acts = actions.reshape(-1).astype(jnp.int32)
    if Bp != B:                               # pad ragged batch (rows trimmed below)
        enc = jnp.pad(enc, ((0, Bp - B), (0, 0)))
        acts = jnp.pad(acts, (0, Bp - B))

    # Row-packed views: bit-identical memory to (Bp, E) / (Bp,) -> free reshapes.
    enc_packed = enc.reshape(Bp // 8, 8 * E)
    acts_packed = acts.reshape(Bp // 8, 8)

    P = tb // 8
    next_p, rew_p = pl.pallas_call(
        partial(_adm_kernel, A=A),
        out_shape=(jax.ShapeDtypeStruct((Bp // 8, 8 * E), jnp.float32),
                   jax.ShapeDtypeStruct((Bp // 8, 8), jnp.float32)),
        grid=(n_blocks,),
        in_specs=[
            pl.BlockSpec((P, 8), lambda i: (i, 0)),            # actions (lane-major)
            pl.BlockSpec((P, 8 * E), lambda i: (i, 0)),        # packed encoding
            pl.BlockSpec((8 * E, 8 * Wp), lambda i: (0, 0)),   # fused weights (resident)
            pl.BlockSpec((1, 8 * Wp), lambda i: (0, 0)),       # fused bias (resident)
        ],
        out_specs=(pl.BlockSpec((P, 8 * E), lambda i: (i, 0)),
                   pl.BlockSpec((P, 8), lambda i: (i, 0))),
        compiler_params=pltpu.CompilerParams(
            dimension_semantics=("parallel",)),
    )(acts_packed, enc_packed, w_big, b_big)

    predict_next = next_p.reshape(Bp, E)      # free reshape (same row-major bytes)
    predict_reward = rew_p.reshape(Bp, 1)
    if Bp != B:
        predict_next = predict_next[:B]
        predict_reward = predict_reward[:B]
    return predict_next, predict_reward


def _reference(encoding, actions, wt, bt, wr, br):
    full = encoding @ wt + bt                                  # (B, A*E)
    rew_full = encoding @ wr + br                              # (B, A)
    E = encoding.shape[1]
    idx = actions[:, None] * E + jnp.arange(E)[None, :]
    nxt = jnp.take_along_axis(full, idx, axis=1)
    rew = jnp.take_along_axis(rew_full, actions[:, None], axis=1)
    return nxt, rew


if __name__ == "__main__":
    # Small shapes consistent with the module.
    E = 16           # feature_size (enc_size)
    A = 4            # num_actions
    H = 32           # hiddens (unused: build_mlp is called with n_layers=0)

    key = jax.random.PRNGKey(0)
    k_wt, k_bt, k_wr, k_br, k1, k2, k3, k4 = jax.random.split(key, 8)

    # Linear-layer parameters stored pre-transposed as (in, out).
    wt = jax.random.normal(k_wt, (E, A * E), jnp.float32) * 0.1
    bt = jax.random.normal(k_bt, (A * E,), jnp.float32) * 0.1
    wr = jax.random.normal(k_wr, (E, A), jnp.float32) * 0.1
    br = jax.random.normal(k_br, (A,), jnp.float32) * 0.1

    # Hoisted once per parameter set (perf-review item).
    w_big, b_big = fuse_params(wt, bt, wr, br)

    # Test 1: small batch (single grid step, row padding to the 64-row tile).
    B = 8
    enc = jax.random.normal(k1, (B, E), jnp.float32)
    act = jax.random.randint(k2, (B,), 0, A, jnp.int32)
    nxt, rew = jax.block_until_ready(
        action_dynamic_model_forward(enc, act, w_big, b_big, num_actions=A))
    nref, rref = _reference(enc, act, wt, bt, wr, br)
    assert nxt.shape == (B, E) and rew.shape == (B, 1)
    assert jnp.allclose(nxt, nref, atol=1e-4, rtol=1e-4)
    assert jnp.allclose(rew, rref, atol=1e-4, rtol=1e-4)

    # Test 2: ragged batch across multiple parallel grid steps.
    B2 = 200
    enc2 = jax.random.normal(k3, (B2, E), jnp.float32)
    act2 = jax.random.randint(k4, (B2,), 0, A, jnp.int32)
    nxt2, rew2 = jax.block_until_ready(
        action_dynamic_model_forward(enc2, act2, w_big, b_big,
                                     num_actions=A, block_b=64))
    nref2, rref2 = _reference(enc2, act2, wt, bt, wr, br)
    assert nxt2.shape == (B2, E) and rew2.shape == (B2, 1)
    assert jnp.allclose(nxt2, nref2, atol=1e-4, rtol=1e-4)
    assert jnp.allclose(rew2, rref2, atol=1e-4, rtol=1e-4)

    print("KERNEL_OK")
</pallas_src>

<mosaic_0001>
module attributes {stable_mosaic.version = 11 : i64} {
  func.func @_adm_kernel(%arg0: i32, %arg1: memref<8x8xi32, #tpu.memory_space<vmem>>, %arg2: memref<8x128xf32, #tpu.memory_space<vmem>>, %arg3: memref<128x1024xf32, #tpu.memory_space<vmem>>, %arg4: memref<1x1024xf32, #tpu.memory_space<vmem>>, %arg5: memref<8x128xf32, #tpu.memory_space<vmem>>, %arg6: memref<8x8xf32, #tpu.memory_space<vmem>>) attributes {dimension_semantics = [#tpu.dimension_semantics<parallel>], iteration_bounds = array<i64: 1>, scalar_prefetch = 0 : i64, scratch_operands = 0 : i64, tpu.core_type = #tpu.core_type<tc>, window_params = [{transform_indices = @transform_0, window_bounds = array<i64: 8, 8>}, {transform_indices = @transform_1, window_bounds = array<i64: 8, 128>}, {pipeline_mode = #tpu.pipeline_mode<synchronous>, transform_indices = @transform_2, window_bounds = array<i64: 128, 1024>}, {pipeline_mode = #tpu.pipeline_mode<synchronous>, transform_indices = @transform_3, window_bounds = array<i64: 1, 1024>}, {transform_indices = @transform_4, window_bounds = array<i64: 8, 128>}, {transform_indices = @transform_5, window_bounds = array<i64: 8, 8>}]} {
    %c0 = arith.constant 0 : index
    %c0_0 = arith.constant 0 : index
    %0 = vector.load %arg2[%c0, %c0_0] : memref<8x128xf32, #tpu.memory_space<vmem>>, vector<8x128xf32>
    %c0_1 = arith.constant 0 : index
    %c0_2 = arith.constant 0 : index
    %1 = vector.load %arg3[%c0_1, %c0_2] : memref<128x1024xf32, #tpu.memory_space<vmem>>, vector<128x1024xf32>
    %cst = arith.constant dense<0.000000e+00> : vector<8x1024xf32>
    %2 = tpu.matmul %0, %1, %cst {dimension_numbers = #tpu.dot_dimension_numbers<[1], [0], [0], [1], [0, 0, 1, 1], [], []>} : vector<8x128xf32>, vector<128x1024xf32>, vector<8x1024xf32> -> vector<8x1024xf32>
    %c0_3 = arith.constant 0 : index
    %c0_4 = arith.constant 0 : index
    %3 = vector.load %arg4[%c0_3, %c0_4] : memref<1x1024xf32, #tpu.memory_space<vmem>>, vector<1x1024xf32>
    %4 = vector.broadcast %3 : vector<1x1024xf32> to vector<8x1024xf32>
    %5 = arith.addf %2, %4 : vector<8x1024xf32>
    %c0_5 = arith.constant 0 : index
    %c0_6 = arith.constant 0 : index
    %6 = vector.load %arg1[%c0_5, %c0_6] : memref<8x8xi32, #tpu.memory_space<vmem>>, vector<8x8xi32>
    %7 = tpu.iota {dimensions = array<i32: 1>} : vector<1x128xi32>
    %c64_i32 = arith.constant 64 : i32
    %8 = vector.broadcast %c64_i32 : i32 to vector<1x128xi32>
    %9 = arith.subi %7, %8 : vector<1x128xi32>
    %c0_i32 = arith.constant 0 : i32
    %10 = vector.broadcast %c0_i32 : i32 to vector<1x128xi32>
    %11 = arith.cmpi sge, %7, %10 : vector<1x128xi32>
    %c16_i32 = arith.constant 16 : i32
    %12 = vector.broadcast %c16_i32 : i32 to vector<1x128xi32>
    %13 = arith.cmpi slt, %7, %12 : vector<1x128xi32>
    %14 = arith.andi %11, %13 : vector<1x128xi1>
    %c0_i32_7 = arith.constant 0 : i32
    %15 = vector.broadcast %c0_i32_7 : i32 to vector<1x128xi32>
    %16 = arith.select %14, %15, %9 : vector<1x128xi1>, vector<1x128xi32>
    %c16_i32_8 = arith.constant 16 : i32
    %17 = vector.broadcast %c16_i32_8 : i32 to vector<1x128xi32>
    %18 = arith.cmpi sge, %7, %17 : vector<1x128xi32>
    %c32_i32 = arith.constant 32 : i32
    %19 = vector.broadcast %c32_i32 : i32 to vector<1x128xi32>
    %20 = arith.cmpi slt, %7, %19 : vector<1x128xi32>
    %21 = arith.andi %18, %20 : vector<1x128xi1>
    %c1_i32 = arith.constant 1 : i32
    %22 = vector.broadcast %c1_i32 : i32 to vector<1x128xi32>
    %23 = arith.select %21, %22, %16 : vector<1x128xi1>, vector<1x128xi32>
    %c32_i32_9 = arith.constant 32 : i32
    %24 = vector.broadcast %c32_i32_9 : i32 to vector<1x128xi32>
    %25 = arith.cmpi sge, %7, %24 : vector<1x128xi32>
    %c48_i32 = arith.constant 48 : i32
    %26 = vector.broadcast %c48_i32 : i32 to vector<1x128xi32>
    %27 = arith.cmpi slt, %7, %26 : vector<1x128xi32>
    %28 = arith.andi %25, %27 : vector<1x128xi1>
    %c2_i32 = arith.constant 2 : i32
    %29 = vector.broadcast %c2_i32 : i32 to vector<1x128xi32>
    %30 = arith.select %28, %29, %23 : vector<1x128xi1>, vector<1x128xi32>
    %c48_i32_10 = arith.constant 48 : i32
    %31 = vector.broadcast %c48_i32_10 : i32 to vector<1x128xi32>
    %32 = arith.cmpi sge, %7, %31 : vector<1x128xi32>
    %c64_i32_11 = arith.constant 64 : i32
    %33 = vector.broadcast %c64_i32_11 : i32 to vector<1x128xi32>
    %34 = arith.cmpi slt, %7, %33 : vector<1x128xi32>
    %35 = arith.andi %32, %34 : vector<1x128xi1>
    %c3_i32 = arith.constant 3 : i32
    %36 = vector.broadcast %c3_i32 : i32 to vector<1x128xi32>
    %37 = arith.select %35, %36, %30 : vector<1x128xi1>, vector<1x128xi32>
    %38 = vector.extract_strided_slice %6 {offsets = [0, 0], sizes = [8, 1], strides = [1, 1]} : vector<8x8xi32> to vector<8x1xi32>
    %39 = vector.extract_strided_slice %5 {offsets = [0, 0], sizes = [8, 128], strides = [1, 1]} : vector<8x1024xf32> to vector<8x128xf32>
    %40 = vector.broadcast %37 : vector<1x128xi32> to vector<8x128xi32>
    %41 = vector.broadcast %38 : vector<8x1xi32> to vector<8x128xi32>
    %42 = arith.cmpi eq, %40, %41 : vector<8x128xi32>
    %cst_12 = arith.constant 0.000000e+00 : f32
    %43 = vector.broadcast %cst_12 : f32 to vector<8x128xf32>
    %44 = arith.select %42, %39, %43 : vector<8x128xi1>, vector<8x128xf32>
    %45 = vector.extract_strided_slice %44 {offsets = [0, 0], sizes = [8, 16], strides = [1, 1]} : vector<8x128xf32> to vector<8x16xf32>
    %46 = vector.extract_strided_slice %44 {offsets = [0, 16], sizes = [8, 16], strides = [1, 1]} : vector<8x128xf32> to vector<8x16xf32>
    %47 = arith.addf %45, %46 : vector<8x16xf32>
    %48 = vector.extract_strided_slice %44 {offsets = [0, 32], sizes = [8, 16], strides = [1, 1]} : vector<8x128xf32> to vector<8x16xf32>
    %49 = arith.addf %47, %48 : vector<8x16xf32>
    %50 = vector.extract_strided_slice %44 {offsets = [0, 48], sizes = [8, 16], strides = [1, 1]} : vector<8x128xf32> to vector<8x16xf32>
    %51 = arith.addf %49, %50 : vector<8x16xf32>
    %52 = vector.extract_strided_slice %44 {offsets = [0, 64], sizes = [8, 4], strides = [1, 1]} : vector<8x128xf32> to vector<8x4xf32>
    %cst_13 = arith.constant dense<0.000000e+00> : vector<8xf32>
    %53 = vector.multi_reduction <add>, %52, %cst_13 [1] : vector<8x4xf32> to vector<8xf32>
    %54 = vector.shape_cast %53 : vector<8xf32> to vector<8x1xf32>
    %c0_14 = arith.constant 0 : index
    %c0_15 = arith.constant 0 : index
    %55 = vector.load %arg5[%c0_14, %c0_15] : memref<8x128xf32, #tpu.memory_space<vmem>>, vector<8x16xf32>
    tpu.vector_store %arg5[%c0_14, %c0_15], %51 {strides = array<i32>} : memref<8x128xf32, #tpu.memory_space<vmem>>, vector<8x16xf32>,
    %c0_16 = arith.constant 0 : index
    %c0_17 = arith.constant 0 : index
    %56 = vector.load %arg6[%c0_16, %c0_17] : memref<8x8xf32, #tpu.memory_space<vmem>>, vector<8x1xf32>
    tpu.vector_store %arg6[%c0_16, %c0_17], %54 {strides = array<i32>} : memref<8x8xf32, #tpu.memory_space<vmem>>, vector<8x1xf32>,
    %57 = vector.extract_strided_slice %6 {offsets = [0, 1], sizes = [8, 1], strides = [1, 1]} : vector<8x8xi32> to vector<8x1xi32>
    %58 = vector.extract_strided_slice %5 {offsets = [0, 128], sizes = [8, 128], strides = [1, 1]} : vector<8x1024xf32> to vector<8x128xf32>
    %59 = vector.broadcast %37 : vector<1x128xi32> to vector<8x128xi32>
    %60 = vector.broadcast %57 : vector<8x1xi32> to vector<8x128xi32>
    %61 = arith.cmpi eq, %59, %60 : vector<8x128xi32>
    %cst_18 = arith.constant 0.000000e+00 : f32
    %62 = vector.broadcast %cst_18 : f32 to vector<8x128xf32>
    %63 = arith.select %61, %58, %62 : vector<8x128xi1>, vector<8x128xf32>
    %64 = vector.extract_strided_slice %63 {offsets = [0, 0], sizes = [8, 16], strides = [1, 1]} : vector<8x128xf32> to vector<8x16xf32>
    %65 = vector.extract_strided_slice %63 {offsets = [0, 16], sizes = [8, 16], strides = [1, 1]} : vector<8x128xf32> to vector<8x16xf32>
    %66 = arith.addf %64, %65 : vector<8x16xf32>
    %67 = vector.extract_strided_slice %63 {offsets = [0, 32], sizes = [8, 16], strides = [1, 1]} : vector<8x128xf32> to vector<8x16xf32>
    %68 = arith.addf %66, %67 : vector<8x16xf32>
    %69 = vector.extract_strided_slice %63 {offsets = [0, 48], sizes = [8, 16], strides = [1, 1]} : vector<8x128xf32> to vector<8x16xf32>
    %70 = arith.addf %68, %69 : vector<8x16xf32>
    %71 = vector.extract_strided_slice %63 {offsets = [0, 64], sizes = [8, 4], strides = [1, 1]} : vector<8x128xf32> to vector<8x4xf32>
    %cst_19 = arith.constant dense<0.000000e+00> : vector<8xf32>
    %72 = vector.multi_reduction <add>, %71, %cst_19 [1] : vector<8x4xf32> to vector<8xf32>
    %73 = vector.shape_cast %72 : vector<8xf32> to vector<8x1xf32>
    %c0_20 = arith.constant 0 : index
    %c16 = arith.constant 16 : index
    %74 = vector.load %arg5[%c0_20, %c16] : memref<8x128xf32, #tpu.memory_space<vmem>>, vector<8x16xf32>
    tpu.vector_store %arg5[%c0_20, %c16], %70 {strides = array<i32>} : memref<8x128xf32, #tpu.memory_space<vmem>>, vector<8x16xf32>,
    %c0_21 = arith.constant 0 : index
    %c1 = arith.constant 1 : index
    %75 = vector.load %arg6[%c0_21, %c1] : memref<8x8xf32, #tpu.memory_space<vmem>>, vector<8x1xf32>
    tpu.vector_store %arg6[%c0_21, %c1], %73 {strides = array<i32>} : memref<8x8xf32, #tpu.memory_space<vmem>>, vector<8x1xf32>,
    %76 = vector.extract_strided_slice %6 {offsets = [0, 2], sizes = [8, 1], strides = [1, 1]} : vector<8x8xi32> to vector<8x1xi32>
    %77 = vector.extract_strided_slice %5 {offsets = [0, 256], sizes = [8, 128], strides = [1, 1]} : vector<8x1024xf32> to vector<8x128xf32>
    %78 = vector.broadcast %37 : vector<1x128xi32> to vector<8x128xi32>
    %79 = vector.broadcast %76 : vector<8x1xi32> to vector<8x128xi32>
    %80 = arith.cmpi eq, %78, %79 : vector<8x128xi32>
    %cst_22 = arith.constant 0.000000e+00 : f32
    %81 = vector.broadcast %cst_22 : f32 to vector<8x128xf32>
    %82 = arith.select %80, %77, %81 : vector<8x128xi1>, vector<8x128xf32>
    %83 = vector.extract_strided_slice %82 {offsets = [0, 0], sizes = [8, 16], strides = [1, 1]} : vector<8x128xf32> to vector<8x16xf32>
    %84 = vector.extract_strided_slice %82 {offsets = [0, 16], sizes = [8, 16], strides = [1, 1]} : vector<8x128xf32> to vector<8x16xf32>
    %85 = arith.addf %83, %84 : vector<8x16xf32>
    %86 = vector.extract_strided_slice %82 {offsets = [0, 32], sizes = [8, 16], strides = [1, 1]} : vector<8x128xf32> to vector<8x16xf32>
    %87 = arith.addf %85, %86 : vector<8x16xf32>
    %88 = vector.extract_strided_slice %82 {offsets = [0, 48], sizes = [8, 16], strides = [1, 1]} : vector<8x128xf32> to vector<8x16xf32>
    %89 = arith.addf %87, %88 : vector<8x16xf32>
    %90 = vector.extract_strided_slice %82 {offsets = [0, 64], sizes = [8, 4], strides = [1, 1]} : vector<8x128xf32> to vector<8x4xf32>
    %cst_23 = arith.constant dense<0.000000e+00> : vector<8xf32>
    %91 = vector.multi_reduction <add>, %90, %cst_23 [1] : vector<8x4xf32> to vector<8xf32>
    %92 = vector.shape_cast %91 : vector<8xf32> to vector<8x1xf32>
    %c0_24 = arith.constant 0 : index
    %c32 = arith.constant 32 : index
    %93 = vector.load %arg5[%c0_24, %c32] : memref<8x128xf32, #tpu.memory_space<vmem>>, vector<8x16xf32>
    tpu.vector_store %arg5[%c0_24, %c32], %89 {strides = array<i32>} : memref<8x128xf32, #tpu.memory_space<vmem>>, vector<8x16xf32>,
    %c0_25 = arith.constant 0 : index
    %c2 = arith.constant 2 : index
    %94 = vector.load %arg6[%c0_25, %c2] : memref<8x8xf32, #tpu.memory_space<vmem>>, vector<8x1xf32>
    tpu.vector_store %arg6[%c0_25, %c2], %92 {strides = array<i32>} : memref<8x8xf32, #tpu.memory_space<vmem>>, vector<8x1xf32>,
    %95 = vector.extract_strided_slice %6 {offsets = [0, 3], sizes = [8, 1], strides = [1, 1]} : vector<8x8xi32> to vector<8x1xi32>
    %96 = vector.extract_strided_slice %5 {offsets = [0, 384], sizes = [8, 128], strides = [1, 1]} : vector<8x1024xf32> to vector<8x128xf32>
    %97 = vector.broadcast %37 : vector<1x128xi32> to vector<8x128xi32>
    %98 = vector.broadcast %95 : vector<8x1xi32> to vector<8x128xi32>
    %99 = arith.cmpi eq, %97, %98 : vector<8x128xi32>
    %cst_26 = arith.constant 0.000000e+00 : f32
    %100 = vector.broadcast %cst_26 : f32 to vector<8x128xf32>
    %101 = arith.select %99, %96, %100 : vector<8x128xi1>, vector<8x128xf32>
    %102 = vector.extract_strided_slice %101 {offsets = [0, 0], sizes = [8, 16], strides = [1, 1]} : vector<8x128xf32> to vector<8x16xf32>
    %103 = vector.extract_strided_slice %101 {offsets = [0, 16], sizes = [8, 16], strides = [1, 1]} : vector<8x128xf32> to vector<8x16xf32>
    %104 = arith.addf %102, %103 : vector<8x16xf32>
    %105 = vector.extract_strided_slice %101 {offsets = [0, 32], sizes = [8, 16], strides = [1, 1]} : vector<8x128xf32> to vector<8x16xf32>
    %106 = arith.addf %104, %105 : vector<8x16xf32>
    %107 = vector.extract_strided_slice %101 {offsets = [0, 48], sizes = [8, 16], strides = [1, 1]} : vector<8x128xf32> to vector<8x16xf32>
    %108 = arith.addf %106, %107 : vector<8x16xf32>
    %109 = vector.extract_strided_slice %101 {offsets = [0, 64], sizes = [8, 4], strides = [1, 1]} : vector<8x128xf32> to vector<8x4xf32>
    %cst_27 = arith.constant dense<0.000000e+00> : vector<8xf32>
    %110 = vector.multi_reduction <add>, %109, %cst_27 [1] : vector<8x4xf32> to vector<8xf32>
    %111 = vector.shape_cast %110 : vector<8xf32> to vector<8x1xf32>
    %c0_28 = arith.constant 0 : index
    %c48 = arith.constant 48 : index
    %112 = vector.load %arg5[%c0_28, %c48] : memref<8x128xf32, #tpu.memory_space<vmem>>, vector<8x16xf32>
    tpu.vector_store %arg5[%c0_28, %c48], %108 {strides = array<i32>} : memref<8x128xf32, #tpu.memory_space<vmem>>, vector<8x16xf32>,
    %c0_29 = arith.constant 0 : index
    %c3 = arith.constant 3 : index
    %113 = vector.load %arg6[%c0_29, %c3] : memref<8x8xf32, #tpu.memory_space<vmem>>, vector<8x1xf32>
    tpu.vector_store %arg6[%c0_29, %c3], %111 {strides = array<i32>} : memref<8x8xf32, #tpu.memory_space<vmem>>, vector<8x1xf32>,
    %114 = vector.extract_strided_slice %6 {offsets = [0, 4], sizes = [8, 1], strides = [1, 1]} : vector<8x8xi32> to vector<8x1xi32>
    %115 = vector.extract_strided_slice %5 {offsets = [0, 512], sizes = [8, 128], strides = [1, 1]} : vector<8x1024xf32> to vector<8x128xf32>
    %116 = vector.broadcast %37 : vector<1x128xi32> to vector<8x128xi32>
    %117 = vector.broadcast %114 : vector<8x1xi32> to vector<8x128xi32>
    %118 = arith.cmpi eq, %116, %117 : vector<8x128xi32>
    %cst_30 = arith.constant 0.000000e+00 : f32
    %119 = vector.broadcast %cst_30 : f32 to vector<8x128xf32>
    %120 = arith.select %118, %115, %119 : vector<8x128xi1>, vector<8x128xf32>
    %121 = vector.extract_strided_slice %120 {offsets = [0, 0], sizes = [8, 16], strides = [1, 1]} : vector<8x128xf32> to vector<8x16xf32>
    %122 = vector.extract_strided_slice %120 {offsets = [0, 16], sizes = [8, 16], strides = [1, 1]} : vector<8x128xf32> to vector<8x16xf32>
    %123 = arith.addf %121, %122 : vector<8x16xf32>
    %124 = vector.extract_strided_slice %120 {offsets = [0, 32], sizes = [8, 16], strides = [1, 1]} : vector<8x128xf32> to vector<8x16xf32>
    %125 = arith.addf %123, %124 : vector<8x16xf32>
    %126 = vector.extract_strided_slice %120 {offsets = [0, 48], sizes = [8, 16], strides = [1, 1]} : vector<8x128xf32> to vector<8x16xf32>
    %127 = arith.addf %125, %126 : vector<8x16xf32>
    %128 = vector.extract_strided_slice %120 {offsets = [0, 64], sizes = [8, 4], strides = [1, 1]} : vector<8x128xf32> to vector<8x4xf32>
    %cst_31 = arith.constant dense<0.000000e+00> : vector<8xf32>
    %129 = vector.multi_reduction <add>, %128, %cst_31 [1] : vector<8x4xf32> to vector<8xf32>
    %130 = vector.shape_cast %129 : vector<8xf32> to vector<8x1xf32>
    %c0_32 = arith.constant 0 : index
    %c64 = arith.constant 64 : index
    %131 = vector.load %arg5[%c0_32, %c64] : memref<8x128xf32, #tpu.memory_space<vmem>>, vector<8x16xf32>
    tpu.vector_store %arg5[%c0_32, %c64], %127 {strides = array<i32>} : memref<8x128xf32, #tpu.memory_space<vmem>>, vector<8x16xf32>,
    %c0_33 = arith.constant 0 : index
    %c4 = arith.constant 4 : index
    %132 = vector.load %arg6[%c0_33, %c4] : memref<8x8xf32, #tpu.memory_space<vmem>>, vector<8x1xf32>
    tpu.vector_store %arg6[%c0_33, %c4], %130 {strides = array<i32>} : memref<8x8xf32, #tpu.memory_space<vmem>>, vector<8x1xf32>,
    %133 = vector.extract_strided_slice %6 {offsets = [0, 5], sizes = [8, 1], strides = [1, 1]} : vector<8x8xi32> to vector<8x1xi32>
    %134 = vector.extract_strided_slice %5 {offsets = [0, 640], sizes = [8, 128], strides = [1, 1]} : vector<8x1024xf32> to vector<8x128xf32>
    %135 = vector.broadcast %37 : vector<1x128xi32> to vector<8x128xi32>
    %136 = vector.broadcast %133 : vector<8x1xi32> to vector<8x128xi32>
    %137 = arith.cmpi eq, %135, %136 : vector<8x128xi32>
    %cst_34 = arith.constant 0.000000e+00 : f32
    %138 = vector.broadcast %cst_34 : f32 to vector<8x128xf32>
    %139 = arith.select %137, %134, %138 : vector<8x128xi1>, vector<8x128xf32>
    %140 = vector.extract_strided_slice %139 {offsets = [0, 0], sizes = [8, 16], strides = [1, 1]} : vector<8x128xf32> to vector<8x16xf32>
    %141 = vector.extract_strided_slice %139 {offsets = [0, 16], sizes = [8, 16], strides = [1, 1]} : vector<8x128xf32> to vector<8x16xf32>
    %142 = arith.addf %140, %141 : vector<8x16xf32>
    %143 = vector.extract_strided_slice %139 {offsets = [0, 32], sizes = [8, 16], strides = [1, 1]} : vector<8x128xf32> to vector<8x16xf32>
    %144 = arith.addf %142, %143 : vector<8x16xf32>
    %145 = vector.extract_strided_slice %139 {offsets = [0, 48], sizes = [8, 16], strides = [1, 1]} : vector<8x128xf32> to vector<8x16xf32>
    %146 = arith.addf %144, %145 : vector<8x16xf32>
    %147 = vector.extract_strided_slice %139 {offsets = [0, 64], sizes = [8, 4], strides = [1, 1]} : vector<8x128xf32> to vector<8x4xf32>
    %cst_35 = arith.constant dense<0.000000e+00> : vector<8xf32>
    %148 = vector.multi_reduction <add>, %147, %cst_35 [1] : vector<8x4xf32> to vector<8xf32>
    %149 = vector.shape_cast %148 : vector<8xf32> to vector<8x1xf32>
    %c0_36 = arith.constant 0 : index
    %c80 = arith.constant 80 : index
    %150 = vector.load %arg5[%c0_36, %c80] : memref<8x128xf32, #tpu.memory_space<vmem>>, vector<8x16xf32>
    tpu.vector_store %arg5[%c0_36, %c80], %146 {strides = array<i32>} : memref<8x128xf32, #tpu.memory_space<vmem>>, vector<8x16xf32>,
    %c0_37 = arith.constant 0 : index
    %c5 = arith.constant 5 : index
    %151 = vector.load %arg6[%c0_37, %c5] : memref<8x8xf32, #tpu.memory_space<vmem>>, vector<8x1xf32>
    tpu.vector_store %arg6[%c0_37, %c5], %149 {strides = array<i32>} : memref<8x8xf32, #tpu.memory_space<vmem>>, vector<8x1xf32>,
    %152 = vector.extract_strided_slice %6 {offsets = [0, 6], sizes = [8, 1], strides = [1, 1]} : vector<8x8xi32> to vector<8x1xi32>
    %153 = vector.extract_strided_slice %5 {offsets = [0, 768], sizes = [8, 128], strides = [1, 1]} : vector<8x1024xf32> to vector<8x128xf32>
    %154 = vector.broadcast %37 : vector<1x128xi32> to vector<8x128xi32>
    %155 = vector.broadcast %152 : vector<8x1xi32> to vector<8x128xi32>
    %156 = arith.cmpi eq, %154, %155 : vector<8x128xi32>
    %cst_38 = arith.constant 0.000000e+00 : f32
    %157 = vector.broadcast %cst_38 : f32 to vector<8x128xf32>
    %158 = arith.select %156, %153, %157 : vector<8x128xi1>, vector<8x128xf32>
    %159 = vector.extract_strided_slice %158 {offsets = [0, 0], sizes = [8, 16], strides = [1, 1]} : vector<8x128xf32> to vector<8x16xf32>
    %160 = vector.extract_strided_slice %158 {offsets = [0, 16], sizes = [8, 16], strides = [1, 1]} : vector<8x128xf32> to vector<8x16xf32>
    %161 = arith.addf %159, %160 : vector<8x16xf32>
    %162 = vector.extract_strided_slice %158 {offsets = [0, 32], sizes = [8, 16], strides = [1, 1]} : vector<8x128xf32> to vector<8x16xf32>
    %163 = arith.addf %161, %162 : vector<8x16xf32>
    %164 = vector.extract_strided_slice %158 {offsets = [0, 48], sizes = [8, 16], strides = [1, 1]} : vector<8x128xf32> to vector<8x16xf32>
    %165 = arith.addf %163, %164 : vector<8x16xf32>
    %166 = vector.extract_strided_slice %158 {offsets = [0, 64], sizes = [8, 4], strides = [1, 1]} : vector<8x128xf32> to vector<8x4xf32>
    %cst_39 = arith.constant dense<0.000000e+00> : vector<8xf32>
    %167 = vector.multi_reduction <add>, %166, %cst_39 [1] : vector<8x4xf32> to vector<8xf32>
    %168 = vector.shape_cast %167 : vector<8xf32> to vector<8x1xf32>
    %c0_40 = arith.constant 0 : index
    %c96 = arith.constant 96 : index
    %169 = vector.load %arg5[%c0_40, %c96] : memref<8x128xf32, #tpu.memory_space<vmem>>, vector<8x16xf32>
    tpu.vector_store %arg5[%c0_40, %c96], %165 {strides = array<i32>} : memref<8x128xf32, #tpu.memory_space<vmem>>, vector<8x16xf32>,
    %c0_41 = arith.constant 0 : index
    %c6 = arith.constant 6 : index
    %170 = vector.load %arg6[%c0_41, %c6] : memref<8x8xf32, #tpu.memory_space<vmem>>, vector<8x1xf32>
    tpu.vector_store %arg6[%c0_41, %c6], %168 {strides = array<i32>} : memref<8x8xf32, #tpu.memory_space<vmem>>, vector<8x1xf32>,
    %171 = vector.extract_strided_slice %6 {offsets = [0, 7], sizes = [8, 1], strides = [1, 1]} : vector<8x8xi32> to vector<8x1xi32>
    %172 = vector.extract_strided_slice %5 {offsets = [0, 896], sizes = [8, 128], strides = [1, 1]} : vector<8x1024xf32> to vector<8x128xf32>
    %173 = vector.broadcast %37 : vector<1x128xi32> to vector<8x128xi32>
    %174 = vector.broadcast %171 : vector<8x1xi32> to vector<8x128xi32>
    %175 = arith.cmpi eq, %173, %174 : vector<8x128xi32>
    %cst_42 = arith.constant 0.000000e+00 : f32
    %176 = vector.broadcast %cst_42 : f32 to vector<8x128xf32>
    %177 = arith.select %175, %172, %176 : vector<8x128xi1>, vector<8x128xf32>
    %178 = vector.extract_strided_slice %177 {offsets = [0, 0], sizes = [8, 16], strides = [1, 1]} : vector<8x128xf32> to vector<8x16xf32>
    %179 = vector.extract_strided_slice %177 {offsets = [0, 16], sizes = [8, 16], strides = [1, 1]} : vector<8x128xf32> to vector<8x16xf32>
    %180 = arith.addf %178, %179 : vector<8x16xf32>
    %181 = vector.extract_strided_slice %177 {offsets = [0, 32], sizes = [8, 16], strides = [1, 1]} : vector<8x128xf32> to vector<8x16xf32>
    %182 = arith.addf %180, %181 : vector<8x16xf32>
    %183 = vector.extract_strided_slice %177 {offsets = [0, 48], sizes = [8, 16], strides = [1, 1]} : vector<8x128xf32> to vector<8x16xf32>
    %184 = arith.addf %182, %183 : vector<8x16xf32>
    %185 = vector.extract_strided_slice %177 {offsets = [0, 64], sizes = [8, 4], strides = [1, 1]} : vector<8x128xf32> to vector<8x4xf32>
    %cst_43 = arith.constant dense<0.000000e+00> : vector<8xf32>
    %186 = vector.multi_reduction <add>, %185, %cst_43 [1] : vector<8x4xf32> to vector<8xf32>
    %187 = vector.shape_cast %186 : vector<8xf32> to vector<8x1xf32>
    %c0_44 = arith.constant 0 : index
    %c112 = arith.constant 112 : index
    %188 = vector.load %arg5[%c0_44, %c112] : memref<8x128xf32, #tpu.memory_space<vmem>>, vector<8x16xf32>
    tpu.vector_store %arg5[%c0_44, %c112], %184 {strides = array<i32>} : memref<8x128xf32, #tpu.memory_space<vmem>>, vector<8x16xf32>,
    %c0_45 = arith.constant 0 : index
    %c7 = arith.constant 7 : index
    %189 = vector.load %arg6[%c0_45, %c7] : memref<8x8xf32, #tpu.memory_space<vmem>>, vector<8x1xf32>
    tpu.vector_store %arg6[%c0_45, %c7], %187 {strides = array<i32>} : memref<8x8xf32, #tpu.memory_space<vmem>>, vector<8x1xf32>,
    return
  }
  func.func @transform_0(%arg0: i32) -> (i32, i32) {
    %c0_i32 = arith.constant 0 : i32
    %c0_i32_0 = arith.constant 0 : i32
    return %arg0, %c0_i32 : i32, i32
  }
  func.func @transform_1(%arg0: i32) -> (i32, i32) {
    %c0_i32 = arith.constant 0 : i32
    %c0_i32_0 = arith.constant 0 : i32
    return %arg0, %c0_i32 : i32, i32
  }
  func.func @transform_2(%arg0: i32) -> (i32, i32) {
    %c0_i32 = arith.constant 0 : i32
    %c0_i32_0 = arith.constant 0 : i32
    %c0_i32_1 = arith.constant 0 : i32
    return %c0_i32, %c0_i32_0 : i32, i32
  }
  func.func @transform_3(%arg0: i32) -> (i32, i32) {
    %c0_i32 = arith.constant 0 : i32
    %c0_i32_0 = arith.constant 0 : i32
    %c0_i32_1 = arith.constant 0 : i32
    return %c0_i32, %c0_i32_0 : i32, i32
  }
  func.func @transform_4(%arg0: i32) -> (i32, i32) {
    %c0_i32 = arith.constant 0 : i32
    %c0_i32_0 = arith.constant 0 : i32
    return %arg0, %c0_i32 : i32, i32
  }
  func.func @transform_5(%arg0: i32) -> (i32, i32) {
    %c0_i32 = arith.constant 0 : i32
    %c0_i32_0 = arith.constant 0 : i32
    return %arg0, %c0_i32 : i32, i32
  }
}

</mosaic_0001>

<llo_original>
// kernel: action_dynamic_model_forward.1
$region0: #{action_dynamic_model_forward.1}
  #allocation0 [shape = 'u32[]', space=smem, size = 0x4, offset = 0x4, fixed_abs, tag = 'smem constant byte address 0x4 - core index']
  #allocation1 [shape = 'u32[144,128]{1,0:T(1,128)}', space=vmem, size = 0x12000, scoped, tag = 'internal scratch']
  %s0 = inlined_call_operand.vmem [shape: s32[8,8], index: 0, kind: input, shape index: {}]
  %s1 = inlined_call_operand.vmem [shape: f32[8,128], index: 1, kind: input, shape index: {}]
  %s2 = inlined_call_operand.hbm [shape: f32[128,1024], index: 2, kind: input, shape index: {}]
  %s3 = inlined_call_operand.vmem [shape: f32[1,1024], index: 3, kind: input, shape index: {}]
  %s4 = inlined_call_operand.vmem [shape: f32[8,128], index: 4, kind: output, shape index: {0}]
  %s5 = inlined_call_operand.vmem [shape: f32[8,8], index: 5, kind: output, shape index: {1}]
  %6 = xla_tuple %s4, %s5
  %s7 = sld [smem:[#allocation0]]
  $region38: #{action_dynamic_model_forward.1} parent=0
    _
  %s9 = ssub.s32 1, %s7
  %s10 = scalar_select 0, %s9, %s7
  $region1: #{action_dynamic_model_forward.1} parent=0
    #allocation2 [shape = 'u8[524288]{0}', space=vmem, size = 0x80000, scoped, tag = 'input window, operand 2, single buffered']
    #allocation3 [shape = 's32[1]{0}', space=sflag, size = 0x4, scoped, tag = 'scoped memory for action_dynamic_model_forward.1']
    %11 = vsyncpa [#allocation3], 0
    // Predicated region
    $region2: #{action_dynamic_model_forward.1} parent=1 // pred_check
      _
    $region3: #{action_dynamic_model_forward.1} parent=1 // pred_check_branch
      %13 = sbr.rel (0) target = $region5
    $region4: #{action_dynamic_model_forward.1} parent=1 // pred_region
      _
    $region5: #{action_dynamic_model_forward.1} parent=1 // pred_fallthru
      _
    // Predicated region
    $region6: #{action_dynamic_model_forward.1} parent=1 // pred_check
      _
    $region7: #{action_dynamic_model_forward.1} parent=1 // pred_check_branch
      %15 = sbr.rel (0) target = $region9
    $region8: #{action_dynamic_model_forward.1} parent=1 // pred_region
      _
    $region9: #{action_dynamic_model_forward.1} parent=1 // pred_fallthru
      _
    // Predicated region
    $region10: #{action_dynamic_model_forward.1} parent=1 // pred_check
      _
    $region11: #{action_dynamic_model_forward.1} parent=1 // pred_check_branch
      %17 = sbr.rel (0) target = $region13
    $region12: #{action_dynamic_model_forward.1} parent=1 // pred_region
      %s19 = ssub.s32 16384, 16384
      %20 = vsyncadd [#allocation3], %s19
      %s21 = sshll.u32 [#allocation2], 4
      %s22 = int_to_ptr.vmem [resolvable:$true] %s21
      %27 = dma.hbm_to_vmem [thread:$0]  %s2, 16384, %s22, [#allocation3], 1024, 1024, 64
    $region13: #{action_dynamic_model_forward.1} parent=1 // pred_fallthru
      _
    // Predicated region
    $region14: #{action_dynamic_model_forward.1} parent=1 // pred_check
      _
    $region15: #{action_dynamic_model_forward.1} parent=1 // pred_check_branch
      %29 = sbr.rel (0) target = $region17
    $region16: #{action_dynamic_model_forward.1} parent=1 // pred_region
      _
    $region17: #{action_dynamic_model_forward.1} parent=1 // pred_fallthru
      _
    // Predicated region
    $region18: #{action_dynamic_model_forward.1} parent=1 // pred_check
      _
    $region19: #{action_dynamic_model_forward.1} parent=1 // pred_check_branch
      %31 = sbr.rel (0) target = $region21
    $region20: #{action_dynamic_model_forward.1} parent=1 // pred_region
      %32 = dma.done [#allocation3], 16384
    $region21: #{action_dynamic_model_forward.1} parent=1 // pred_fallthru
      _
    %v33 = vld [vmem:[%s1] sm:$0xff]
    %v34 = vld [vmem:[#allocation2] sm:$0xff]
    %v35 = vld [vmem:[#allocation2 + $0x8] sm:$0xff]
    %v36 = vld [vmem:[#allocation2 + $0x10] sm:$0xff]
    %v37 = vld [vmem:[#allocation2 + $0x18] sm:$0xff]
    %v38 = vld [vmem:[#allocation2 + $0x20] sm:$0xff]
    %v39 = vld [vmem:[#allocation2 + $0x28] sm:$0xff]
    %v40 = vld [vmem:[#allocation2 + $0x30] sm:$0xff]
    %v41 = vld [vmem:[#allocation2 + $0x38] sm:$0xff]
    %v42 = vld [vmem:[#allocation2 + $0x40] sm:$0xff]
    %v43 = vld [vmem:[#allocation2 + $0x48] sm:$0xff]
    %v44 = vld [vmem:[#allocation2 + $0x50] sm:$0xff]
    %v45 = vld [vmem:[#allocation2 + $0x58] sm:$0xff]
    %v46 = vld [vmem:[#allocation2 + $0x60] sm:$0xff]
    %v47 = vld [vmem:[#allocation2 + $0x68] sm:$0xff]
    %v48 = vld [vmem:[#allocation2 + $0x70] sm:$0xff]
    %v49 = vld [vmem:[#allocation2 + $0x78] sm:$0xff]
    %v50 = vld [vmem:[#allocation2 + $0x80] sm:$0xff]
    %v51 = vld [vmem:[#allocation2 + $0x88] sm:$0xff]
    %v52 = vld [vmem:[#allocation2 + $0x90] sm:$0xff]
    %v53 = vld [vmem:[#allocation2 + $0x98] sm:$0xff]
    %v54 = vld [vmem:[#allocation2 + $0xa0] sm:$0xff]
    %v55 = vld [vmem:[#allocation2 + $0xa8] sm:$0xff]
    %v56 = vld [vmem:[#allocation2 + $0xb0] sm:$0xff]
    %v57 = vld [vmem:[#allocation2 + $0xb8] sm:$0xff]
    %v58 = vld [vmem:[#allocation2 + $0xc0] sm:$0xff]
    %v59 = vld [vmem:[#allocation2 + $0xc8] sm:$0xff]
    %v60 = vld [vmem:[#allocation2 + $0xd0] sm:$0xff]
    %v61 = vld [vmem:[#allocation2 + $0xd8] sm:$0xff]
    %v62 = vld [vmem:[#allocation2 + $0xe0] sm:$0xff]
    %v63 = vld [vmem:[#allocation2 + $0xe8] sm:$0xff]
    %v64 = vld [vmem:[#allocation2 + $0xf0] sm:$0xff]
    %v65 = vld [vmem:[#allocation2 + $0xf8] sm:$0xff]
    %v66 = vld [vmem:[#allocation2 + $0x100] sm:$0xff]
    %v67 = vld [vmem:[#allocation2 + $0x108] sm:$0xff]
    %v68 = vld [vmem:[#allocation2 + $0x110] sm:$0xff]
    %v69 = vld [vmem:[#allocation2 + $0x118] sm:$0xff]
    %v70 = vld [vmem:[#allocation2 + $0x120] sm:$0xff]
    %v71 = vld [vmem:[#allocation2 + $0x128] sm:$0xff]
    %v72 = vld [vmem:[#allocation2 + $0x130] sm:$0xff]
    %v73 = vld [vmem:[#allocation2 + $0x138] sm:$0xff]
    %v74 = vld [vmem:[#allocation2 + $0x140] sm:$0xff]
    %v75 = vld [vmem:[#allocation2 + $0x148] sm:$0xff]
    %v76 = vld [vmem:[#allocation2 + $0x150] sm:$0xff]
    %v77 = vld [vmem:[#allocation2 + $0x158] sm:$0xff]
    %v78 = vld [vmem:[#allocation2 + $0x160] sm:$0xff]
    %v79 = vld [vmem:[#allocation2 + $0x168] sm:$0xff]
    %v80 = vld [vmem:[#allocation2 + $0x170] sm:$0xff]
    %v81 = vld [vmem:[#allocation2 + $0x178] sm:$0xff]
    %v82 = vld [vmem:[#allocation2 + $0x180] sm:$0xff]
    %v83 = vld [vmem:[#allocation2 + $0x188] sm:$0xff]
    %v84 = vld [vmem:[#allocation2 + $0x190] sm:$0xff]
    %v85 = vld [vmem:[#allocation2 + $0x198] sm:$0xff]
    %v86 = vld [vmem:[#allocation2 + $0x1a0] sm:$0xff]
    %v87 = vld [vmem:[#allocation2 + $0x1a8] sm:$0xff]
    %v88 = vld [vmem:[#allocation2 + $0x1b0] sm:$0xff]
    %v89 = vld [vmem:[#allocation2 + $0x1b8] sm:$0xff]
    %v90 = vld [vmem:[#allocation2 + $0x1c0] sm:$0xff]
    %v91 = vld [vmem:[#allocation2 + $0x1c8] sm:$0xff]
    %v92 = vld [vmem:[#allocation2 + $0x1d0] sm:$0xff]
    %v93 = vld [vmem:[#allocation2 + $0x1d8] sm:$0xff]
    %v94 = vld [vmem:[#allocation2 + $0x1e0] sm:$0xff]
    %v95 = vld [vmem:[#allocation2 + $0x1e8] sm:$0xff]
    %v96 = vld [vmem:[#allocation2 + $0x1f0] sm:$0xff]
    %v97 = vld [vmem:[#allocation2 + $0x1f8] sm:$0xff]
    %v98 = vld [vmem:[#allocation2 + $0x200] sm:$0xff]
    %v99 = vld [vmem:[#allocation2 + $0x208] sm:$0xff]
    %v100 = vld [vmem:[#allocation2 + $0x210] sm:$0xff]
    %v101 = vld [vmem:[#allocation2 + $0x218] sm:$0xff]
    %v102 = vld [vmem:[#allocation2 + $0x220] sm:$0xff]
    %v103 = vld [vmem:[#allocation2 + $0x228] sm:$0xff]
    %v104 = vld [vmem:[#allocation2 + $0x230] sm:$0xff]
    %v105 = vld [vmem:[#allocation2 + $0x238] sm:$0xff]
    %v106 = vld [vmem:[#allocation2 + $0x240] sm:$0xff]
    %v107 = vld [vmem:[#allocation2 + $0x248] sm:$0xff]
    %v108 = vld [vmem:[#allocation2 + $0x250] sm:$0xff]
    %v109 = vld [vmem:[#allocation2 + $0x258] sm:$0xff]
    %v110 = vld [vmem:[#allocation2 + $0x260] sm:$0xff]
    %v111 = vld [vmem:[#allocation2 + $0x268] sm:$0xff]
    %v112 = vld [vmem:[#allocation2 + $0x270] sm:$0xff]
    %v113 = vld [vmem:[#allocation2 + $0x278] sm:$0xff]
    %v114 = vld [vmem:[#allocation2 + $0x280] sm:$0xff]
    %v115 = vld [vmem:[#allocation2 + $0x288] sm:$0xff]
    %v116 = vld [vmem:[#allocation2 + $0x290] sm:$0xff]
    %v117 = vld [vmem:[#allocation2 + $0x298] sm:$0xff]
    %v118 = vld [vmem:[#allocation2 + $0x2a0] sm:$0xff]
    %v119 = vld [vmem:[#allocation2 + $0x2a8] sm:$0xff]
    %v120 = vld [vmem:[#allocation2 + $0x2b0] sm:$0xff]
    %v121 = vld [vmem:[#allocation2 + $0x2b8] sm:$0xff]
    %v122 = vld [vmem:[#allocation2 + $0x2c0] sm:$0xff]
    %v123 = vld [vmem:[#allocation2 + $0x2c8] sm:$0xff]
    %v124 = vld [vmem:[#allocation2 + $0x2d0] sm:$0xff]
    %v125 = vld [vmem:[#allocation2 + $0x2d8] sm:$0xff]
    %v126 = vld [vmem:[#allocation2 + $0x2e0] sm:$0xff]
    %v127 = vld [vmem:[#allocation2 + $0x2e8] sm:$0xff]
    %v128 = vld [vmem:[#allocation2 + $0x2f0] sm:$0xff]
    %v129 = vld [vmem:[#allocation2 + $0x2f8] sm:$0xff]
    %v130 = vld [vmem:[#allocation2 + $0x300] sm:$0xff]
    %v131 = vld [vmem:[#allocation2 + $0x308] sm:$0xff]
    %v132 = vld [vmem:[#allocation2 + $0x310] sm:$0xff]
    %v133 = vld [vmem:[#allocation2 + $0x318] sm:$0xff]
    %v134 = vld [vmem:[#allocation2 + $0x320] sm:$0xff]
    %v135 = vld [vmem:[#allocation2 + $0x328] sm:$0xff]
    %v136 = vld [vmem:[#allocation2 + $0x330] sm:$0xff]
    %v137 = vld [vmem:[#allocation2 + $0x338] sm:$0xff]
    %v138 = vld [vmem:[#allocation2 + $0x340] sm:$0xff]
    %v139 = vld [vmem:[#allocation2 + $0x348] sm:$0xff]
    %v140 = vld [vmem:[#allocation2 + $0x350] sm:$0xff]
    %v141 = vld [vmem:[#allocation2 + $0x358] sm:$0xff]
    %v142 = vld [vmem:[#allocation2 + $0x360] sm:$0xff]
    %v143 = vld [vmem:[#allocation2 + $0x368] sm:$0xff]
    %v144 = vld [vmem:[#allocation2 + $0x370] sm:$0xff]
    %v145 = vld [vmem:[#allocation2 + $0x378] sm:$0xff]
    %v146 = vld [vmem:[#allocation2 + $0x380] sm:$0xff]
    %v147 = vld [vmem:[#allocation2 + $0x388] sm:$0xff]
    %v148 = vld [vmem:[#allocation2 + $0x390] sm:$0xff]
    %v149 = vld [vmem:[#allocation2 + $0x398] sm:$0xff]
    %v150 = vld [vmem:[#allocation2 + $0x3a0] sm:$0xff]
    %v151 = vld [vmem:[#allocation2 + $0x3a8] sm:$0xff]
    %v152 = vld [vmem:[#allocation2 + $0x3b0] sm:$0xff]
    %v153 = vld [vmem:[#allocation2 + $0x3b8] sm:$0xff]
    %v154 = vld [vmem:[#allocation2 + $0x3c0] sm:$0xff]
    %v155 = vld [vmem:[#allocation2 + $0x3c8] sm:$0xff]
    %v156 = vld [vmem:[#allocation2 + $0x3d0] sm:$0xff]
    %v157 = vld [vmem:[#allocation2 + $0x3d8] sm:$0xff]
    %v158 = vld [vmem:[#allocation2 + $0x3e0] sm:$0xff]
    %v159 = vld [vmem:[#allocation2 + $0x3e8] sm:$0xff]
    %v160 = vld [vmem:[#allocation2 + $0x3f0] sm:$0xff]
    %v161 = vld [vmem:[#allocation2 + $0x3f8] sm:$0xff]
    %v162 = vld [vmem:[%s3] sm:$0xff]
    %v164 = vlaneseq
    %v165 = vshrl.u32 %v164, 7
    %v166 = vsub.s32 0, %v165
    %v167 = vrot.slane %v162, %v166
    %v168 = vlaneseq
    %v169 = vshrl.u32 %v168, 7
    %v170 = vsub.s32 1, %v169
    %v171 = vrot.slane %v162, %v170
    %v172 = vlaneseq
    %v173 = vshrl.u32 %v172, 7
    %v174 = vsub.s32 2, %v173
    %v175 = vrot.slane %v162, %v174
    %v176 = vlaneseq
    %v177 = vshrl.u32 %v176, 7
    %v178 = vsub.s32 3, %v177
    %v179 = vrot.slane %v162, %v178
    %v180 = vlaneseq
    %v181 = vshrl.u32 %v180, 7
    %v182 = vsub.s32 4, %v181
    %v183 = vrot.slane %v162, %v182
    %v184 = vlaneseq
    %v185 = vshrl.u32 %v184, 7
    %v186 = vsub.s32 5, %v185
    %v187 = vrot.slane %v162, %v186
    %v188 = vlaneseq
    %v189 = vshrl.u32 %v188, 7
    %v190 = vsub.s32 6, %v189
    %v191 = vrot.slane %v162, %v190
    %v192 = vlaneseq
    %v193 = vshrl.u32 %v192, 7
    %v194 = vsub.s32 7, %v193
    %v195 = vrot.slane %v162, %v194
    %204 = vmatprep.subr.mxu0 %v155
    %205 = vmatpush1.msra.mxu0 %v154
    %206 = vmatprep.subr.mxu0 %v147
    %207 = vmatpush1.msra.mxu0 %v146
    %208 = vmatprep.subr.mxu0 %v139
    %209 = vmatpush1.msra.mxu0 %v138
    %210 = vmatprep.subr.mxu0 %v131
    %211 = vmatpush1.msra.mxu0 %v130
    %212 = vmatprep.subr.mxu0 %v123
    %213 = vmatpush1.msra.mxu0 %v122
    %214 = vmatprep.subr.mxu0 %v115
    %215 = vmatpush1.msra.mxu0 %v114
    %216 = vmatprep.subr.mxu0 %v107
    %217 = vmatpush1.msra.mxu0 %v106
    %218 = vmatprep.subr.mxu0 %v99
    %219 = vmatpush1.msra.mxu0 %v98
    %220 = vmatprep.subr.mxu0 %v91
    %221 = vmatpush1.msra.mxu0 %v90
    %222 = vmatprep.subr.mxu0 %v83
    %223 = vmatpush1.msra.mxu0 %v82
    %224 = vmatprep.subr.mxu0 %v75
    %225 = vmatpush1.msra.mxu0 %v74
    %226 = vmatprep.subr.mxu0 %v67
    %227 = vmatpush1.msra.mxu0 %v66
    %228 = vmatprep.subr.mxu0 %v59
    %229 = vmatpush1.msra.mxu0 %v58
    %230 = vmatprep.subr.mxu0 %v51
    %231 = vmatpush1.msra.mxu0 %v50
    %232 = vmatprep.subr.mxu0 %v43
    %233 = vmatpush1.msra.mxu0 %v42
    %234 = vmatprep.subr.mxu0 %v35
    %235 = vmatpush1.msra.mxu0 %v34
    %236 = vmatprep.subr.mxu0 0.0
    %237 = vmatpush2.msra.mxu0 0.0
    %238 = vmatprep.subr.mxu0 0.0
    %239 = vmatpush2.msra.mxu0 0.0
    %240 = vmatprep.subr.mxu0 0.0
    %241 = vmatpush2.msra.mxu0 0.0
    %242 = vmatprep.subr.mxu0 0.0
    %243 = vmatpush2.msra.mxu0 0.0
    %244 = vmatprep.subr.mxu0 0.0
    %245 = vmatpush2.msra.mxu0 0.0
    %246 = vmatprep.subr.mxu0 0.0
    %247 = vmatpush2.msra.mxu0 0.0
    %248 = vmatprep.subr.mxu0 0.0
    %249 = vmatpush2.msra.mxu0 0.0
    %250 = vmatprep.subr.mxu0 0.0
    %251 = vmatpush2.msra.mxu0 0.0
    %252 = vmatprep.subr.mxu0 0.0
    %253 = vmatpush2.msra.mxu0 0.0
    %254 = vmatprep.subr.mxu0 0.0
    %255 = vmatpush2.msra.mxu0 0.0
    %256 = vmatprep.subr.mxu0 0.0
    %257 = vmatpush2.msra.mxu0 0.0
    %258 = vmatprep.subr.mxu0 0.0
    %259 = vmatpush2.msra.mxu0 0.0
    %260 = vmatprep.subr.mxu0 0.0
    %261 = vmatpush2.msra.mxu0 0.0
    %262 = vmatprep.subr.mxu0 0.0
    %263 = vmatpush2.msra.mxu0 0.0
    %264 = vmatprep.subr.mxu0 0.0
    %265 = vmatpush2.msra.mxu0 0.0
    %266 = vmatprep.subr.mxu0 0.0
    %267 = vmatpush2.msra.mxu0 0.0
    %268 = vmatprep.mubr.f32.mxu0 0.0
    %269 = vmatmul.mubr.f32.gmra.mxu0 %v33
    %v270 = vpop.f32.mrf.mxu0
    %v271 = vadd.f32 %v167, %v270
    %v272 = vpop.f32.mrf.mxu0
    %v273 = vadd.f32 %v171, %v272
    %274 = vdwg.mxu0
    %275 = vmatprep.subr.mxu0 %v157
    %276 = vmatpush1.msra.mxu0 %v156
    %277 = vmatprep.subr.mxu0 %v149
    %278 = vmatpush1.msra.mxu0 %v148
    %279 = vmatprep.subr.mxu0 %v141
    %280 = vmatpush1.msra.mxu0 %v140
    %281 = vmatprep.subr.mxu0 %v133
    %282 = vmatpush1.msra.mxu0 %v132
    %283 = vmatprep.subr.mxu0 %v125
    %284 = vmatpush1.msra.mxu0 %v124
    %285 = vmatprep.subr.mxu0 %v117
    %286 = vmatpush1.msra.mxu0 %v116
    %287 = vmatprep.subr.mxu0 %v109
    %288 = vmatpush1.msra.mxu0 %v108
    %289 = vmatprep.subr.mxu0 %v101
    %290 = vmatpush1.msra.mxu0 %v100
    %291 = vmatprep.subr.mxu0 %v93
    %292 = vmatpush1.msra.mxu0 %v92
    %293 = vmatprep.subr.mxu0 %v85
    %294 = vmatpush1.msra.mxu0 %v84
    %295 = vmatprep.subr.mxu0 %v77
    %296 = vmatpush1.msra.mxu0 %v76
    %297 = vmatprep.subr.mxu0 %v69
    %298 = vmatpush1.msra.mxu0 %v68
    %299 = vmatprep.subr.mxu0 %v61
    %300 = vmatpush1.msra.mxu0 %v60
    %301 = vmatprep.subr.mxu0 %v53
    %302 = vmatpush1.msra.mxu0 %v52
    %303 = vmatprep.subr.mxu0 %v45
    %304 = vmatpush1.msra.mxu0 %v44
    %305 = vmatprep.subr.mxu0 %v37
    %306 = vmatpush1.msra.mxu0 %v36
    %307 = vmatprep.subr.mxu0 0.0
    %308 = vmatpush2.msra.mxu0 0.0
    %309 = vmatprep.subr.mxu0 0.0
    %310 = vmatpush2.msra.mxu0 0.0
    %311 = vmatprep.subr.mxu0 0.0
    %312 = vmatpush2.msra.mxu0 0.0
    %313 = vmatprep.subr.mxu0 0.0
    %314 = vmatpush2.msra.mxu0 0.0
    %315 = vmatprep.subr.mxu0 0.0
    %316 = vmatpush2.msra.mxu0 0.0
    %317 = vmatprep.subr.mxu0 0.0
    %318 = vmatpush2.msra.mxu0 0.0
    %319 = vmatprep.subr.mxu0 0.0
    %320 = vmatpush2.msra.mxu0 0.0
    %321 = vmatprep.subr.mxu0 0.0
    %322 = vmatpush2.msra.mxu0 0.0
    %323 = vmatprep.subr.mxu0 0.0
    %324 = vmatpush2.msra.mxu0 0.0
    %325 = vmatprep.subr.mxu0 0.0
    %326 = vmatpush2.msra.mxu0 0.0
    %327 = vmatprep.subr.mxu0 0.0
    %328 = vmatpush2.msra.mxu0 0.0
    %329 = vmatprep.subr.mxu0 0.0
    %330 = vmatpush2.msra.mxu0 0.0
    %331 = vmatprep.subr.mxu0 0.0
    %332 = vmatpush2.msra.mxu0 0.0
    %333 = vmatprep.subr.mxu0 0.0
    %334 = vmatpush2.msra.mxu0 0.0
    %335 = vmatprep.subr.mxu0 0.0
    %336 = vmatpush2.msra.mxu0 0.0
    %337 = vmatprep.subr.mxu0 0.0
    %338 = vmatpush2.msra.mxu0 0.0
    %339 = vmatprep.mubr.f32.mxu0 0.0
    %340 = vmatmul.mubr.f32.gmra.mxu0 %v33
    %v341 = vpop.f32.mrf.mxu0
    %v342 = vadd.f32 %v175, %v341
    %v343 = vpop.f32.mrf.mxu0
    %v344 = vadd.f32 %v179, %v343
    %345 = vdwg.mxu0
    %346 = vmatprep.subr.mxu0 %v159
    %347 = vmatpush1.msra.mxu0 %v158
    %348 = vmatprep.subr.mxu0 %v151
    %349 = vmatpush1.msra.mxu0 %v150
    %350 = vmatprep.subr.mxu0 %v143
    %351 = vmatpush1.msra.mxu0 %v142
    %352 = vmatprep.subr.mxu0 %v135
    %353 = vmatpush1.msra.mxu0 %v134
    %354 = vmatprep.subr.mxu0 %v127
    %355 = vmatpush1.msra.mxu0 %v126
    %356 = vmatprep.subr.mxu0 %v119
    %357 = vmatpush1.msra.mxu0 %v118
    %358 = vmatprep.subr.mxu0 %v111
    %359 = vmatpush1.msra.mxu0 %v110
    %360 = vmatprep.subr.mxu0 %v103
    %361 = vmatpush1.msra.mxu0 %v102
    %362 = vmatprep.subr.mxu0 %v95
    %363 = vmatpush1.msra.mxu0 %v94
    %364 = vmatprep.subr.mxu0 %v87
    %365 = vmatpush1.msra.mxu0 %v86
    %366 = vmatprep.subr.mxu0 %v79
    %367 = vmatpush1.msra.mxu0 %v78
    %368 = vmatprep.subr.mxu0 %v71
    %369 = vmatpush1.msra.mxu0 %v70
    %370 = vmatprep.subr.mxu0 %v63
    %371 = vmatpush1.msra.mxu0 %v62
    %372 = vmatprep.subr.mxu0 %v55
    %373 = vmatpush1.msra.mxu0 %v54
    %374 = vmatprep.subr.mxu0 %v47
    %375 = vmatpush1.msra.mxu0 %v46
    %376 = vmatprep.subr.mxu0 %v39
    %377 = vmatpush1.msra.mxu0 %v38
    %378 = vmatprep.subr.mxu0 0.0
    %379 = vmatpush2.msra.mxu0 0.0
    %380 = vmatprep.subr.mxu0 0.0
    %381 = vmatpush2.msra.mxu0 0.0
    %382 = vmatprep.subr.mxu0 0.0
    %383 = vmatpush2.msra.mxu0 0.0
    %384 = vmatprep.subr.mxu0 0.0
    %385 = vmatpush2.msra.mxu0 0.0
    %386 = vmatprep.subr.mxu0 0.0
    %387 = vmatpush2.msra.mxu0 0.0
    %388 = vmatprep.subr.mxu0 0.0
    %389 = vmatpush2.msra.mxu0 0.0
    %390 = vmatprep.subr.mxu0 0.0
    %391 = vmatpush2.msra.mxu0 0.0
    %392 = vmatprep.subr.mxu0 0.0
    %393 = vmatpush2.msra.mxu0 0.0
    %394 = vmatprep.subr.mxu0 0.0
    %395 = vmatpush2.msra.mxu0 0.0
    %396 = vmatprep.subr.mxu0 0.0
    %397 = vmatpush2.msra.mxu0 0.0
    %398 = vmatprep.subr.mxu0 0.0
    %399 = vmatpush2.msra.mxu0 0.0
    %400 = vmatprep.subr.mxu0 0.0
    %401 = vmatpush2.msra.mxu0 0.0
    %402 = vmatprep.subr.mxu0 0.0
    %403 = vmatpush2.msra.mxu0 0.0
    %404 = vmatprep.subr.mxu0 0.0
    %405 = vmatpush2.msra.mxu0 0.0
    %406 = vmatprep.subr.mxu0 0.0
    %407 = vmatpush2.msra.mxu0 0.0
    %408 = vmatprep.subr.mxu0 0.0
    %409 = vmatpush2.msra.mxu0 0.0
    %410 = vmatprep.mubr.f32.mxu0 0.0
    %411 = vmatmul.mubr.f32.gmra.mxu0 %v33
    %v412 = vpop.f32.mrf.mxu0
    %v413 = vadd.f32 %v183, %v412
    %v414 = vpop.f32.mrf.mxu0
    %v415 = vadd.f32 %v187, %v414
    %416 = vdwg.mxu0
    %417 = vmatprep.subr.mxu0 %v161
    %418 = vmatpush1.msra.mxu0 %v160
    %419 = vmatprep.subr.mxu0 %v153
    %420 = vmatpush1.msra.mxu0 %v152
    %421 = vmatprep.subr.mxu0 %v145
    %422 = vmatpush1.msra.mxu0 %v144
    %423 = vmatprep.subr.mxu0 %v137
    %424 = vmatpush1.msra.mxu0 %v136
    %425 = vmatprep.subr.mxu0 %v129
    %426 = vmatpush1.msra.mxu0 %v128
    %427 = vmatprep.subr.mxu0 %v121
    %428 = vmatpush1.msra.mxu0 %v120
    %429 = vmatprep.subr.mxu0 %v113
    %430 = vmatpush1.msra.mxu0 %v112
    %431 = vmatprep.subr.mxu0 %v105
    %432 = vmatpush1.msra.mxu0 %v104
    %433 = vmatprep.subr.mxu0 %v97
    %434 = vmatpush1.msra.mxu0 %v96
    %435 = vmatprep.subr.mxu0 %v89
    %436 = vmatpush1.msra.mxu0 %v88
    %437 = vmatprep.subr.mxu0 %v81
    %438 = vmatpush1.msra.mxu0 %v80
    %439 = vmatprep.subr.mxu0 %v73
    %440 = vmatpush1.msra.mxu0 %v72
    %441 = vmatprep.subr.mxu0 %v65
    %442 = vmatpush1.msra.mxu0 %v64
    %443 = vmatprep.subr.mxu0 %v57
    %444 = vmatpush1.msra.mxu0 %v56
    %445 = vmatprep.subr.mxu0 %v49
    %446 = vmatpush1.msra.mxu0 %v48
    %447 = vmatprep.subr.mxu0 %v41
    %448 = vmatpush1.msra.mxu0 %v40
    %449 = vmatprep.subr.mxu0 0.0
    %450 = vmatpush2.msra.mxu0 0.0
    %451 = vmatprep.subr.mxu0 0.0
    %452 = vmatpush2.msra.mxu0 0.0
    %453 = vmatprep.subr.mxu0 0.0
    %454 = vmatpush2.msra.mxu0 0.0
    %455 = vmatprep.subr.mxu0 0.0
    %456 = vmatpush2.msra.mxu0 0.0
    %457 = vmatprep.subr.mxu0 0.0
    %458 = vmatpush2.msra.mxu0 0.0
    %459 = vmatprep.subr.mxu0 0.0
    %460 = vmatpush2.msra.mxu0 0.0
    %461 = vmatprep.subr.mxu0 0.0
    %462 = vmatpush2.msra.mxu0 0.0
    %463 = vmatprep.subr.mxu0 0.0
    %464 = vmatpush2.msra.mxu0 0.0
    %465 = vmatprep.subr.mxu0 0.0
    %466 = vmatpush2.msra.mxu0 0.0
    %467 = vmatprep.subr.mxu0 0.0
    %468 = vmatpush2.msra.mxu0 0.0
    %469 = vmatprep.subr.mxu0 0.0
    %470 = vmatpush2.msra.mxu0 0.0
    %471 = vmatprep.subr.mxu0 0.0
    %472 = vmatpush2.msra.mxu0 0.0
    %473 = vmatprep.subr.mxu0 0.0
    %474 = vmatpush2.msra.mxu0 0.0
    %475 = vmatprep.subr.mxu0 0.0
    %476 = vmatpush2.msra.mxu0 0.0
    %477 = vmatprep.subr.mxu0 0.0
    %478 = vmatpush2.msra.mxu0 0.0
    %479 = vmatprep.subr.mxu0 0.0
    %480 = vmatpush2.msra.mxu0 0.0
    %481 = vmatprep.mubr.f32.mxu0 0.0
    %482 = vmatmul.mubr.f32.gmra.mxu0 %v33
    %v483 = vpop.f32.mrf.mxu0
    %v484 = vadd.f32 %v191, %v483
    %v485 = vpop.f32.mrf.mxu0
    %v486 = vadd.f32 %v195, %v485
    %487 = vdwg.mxu0
    %v488 = vld [vmem:[%s0] sm:$0xff]
    %v489 = vlaneseq
    %v490 = vand.u32 %v489, 127
    %v491 = vsub.s32 %v490, 64
    %vm492 = vcmp.ge.s32.totalorder %v490, 0
    %vm493 = vcmp.lt.s32.totalorder %v490, 16
    %vm494 = vmand %vm492, %vm493
    %v495 = vsel %vm494, 0, %v491
    %vm496 = vcmp.ge.s32.totalorder %v490, 16
    %vm497 = vcmp.lt.s32.totalorder %v490, 32
    %vm498 = vmand %vm496, %vm497
    %v499 = vsel %vm498, 1, %v495
    %vm500 = vcmp.ge.s32.totalorder %v490, 32
    %vm501 = vcmp.lt.s32.totalorder %v490, 48
    %vm502 = vmand %vm500, %vm501
    %v503 = vsel %vm502, 2, %v499
    %vm504 = vcmp.ge.s32.totalorder %v490, 48
    %vm505 = vcmp.lt.s32.totalorder %v490, 64
    %vm506 = vmand %vm504, %vm505
    %v507 = vsel %vm506, 3, %v503
    %508 = vset.pattern.permute.xlu0 0
    %509 = vperm.xlu0 %508, %v488
    %v510 = vpop.permute.xlu0 %509
    %vm511 = vcmp.eq.s32.totalorder %v507, %v510
    %v512 = vsel %vm511, %v271, 0.0
    %514 = vrot.lane.b32.xlu0 %v512, 112
    %v515 = vpop.permute.xlu0 %514
    %v517 = vadd.f32 %v512, %v515
    %518 = vrot.lane.b32.xlu0 %v512, 96
    %v519 = vpop.permute.xlu0 %518
    %v521 = vadd.f32 %v517, %v519
    %522 = vrot.lane.b32.xlu0 %v512, 80
    %v523 = vpop.permute.xlu0 %522
    %v525 = vadd.f32 %v521, %v523
    %526 = vrot.lane.b32.xlu0 %v512, 64
    %v527 = vpop.permute.xlu0 %526
    %vm529 = vcmask 31744
    %v530 = vsel %vm529, %v527, 0.0
    %531 = vadd.xlane.f32.xlu0 %v530
    %v532 = vpop.xlane.xlu0 %531
    %vm533 = vcmask 130048
    %534 = vst.msk [vmem:[%s4] sm:$0xff] %vm533, %v525
    %vm535 = vcmask 7168
    %536 = vst.msk [vmem:[%s5] sm:$0xff] %vm535, %v532
    %537 = vset.pattern.permute.xlu0 1
    %538 = vperm.xlu0 %537, %v488
    %v539 = vpop.permute.xlu0 %538
    %vm540 = vcmp.eq.s32.totalorder %v507, %v539
    %v541 = vsel %vm540, %v273, 0.0
    %543 = vrot.lane.b32.xlu0 %v541, 112
    %v544 = vpop.permute.xlu0 %543
    %v546 = vadd.f32 %v541, %v544
    %547 = vrot.lane.b32.xlu0 %v541, 96
    %v548 = vpop.permute.xlu0 %547
    %v550 = vadd.f32 %v546, %v548
    %551 = vrot.lane.b32.xlu0 %v541, 80
    %v552 = vpop.permute.xlu0 %551
    %v554 = vadd.f32 %v550, %v552
    %555 = vrot.lane.b32.xlu0 %v541, 64
    %v556 = vpop.permute.xlu0 %555
    %v558 = vsel %vm529, %v556, 0.0
    %559 = vadd.xlane.f32.xlu0 %v558
    %v560 = vpop.xlane.xlu0 %559
    %562 = vrot.lane.b32.xlu0 %v554, 16
    %v563 = vpop.permute.xlu0 %562
    %vm565 = vcmask 261248
    %566 = vst.msk [vmem:[%s4] sm:$0xff] %vm565, %v563
    %vm567 = vcmask 15368
    %568 = vst.msk [vmem:[%s5] sm:$0xff] %vm567, %v560
    %569 = vset.pattern.permute.xlu0 2
    %570 = vperm.xlu0 %569, %v488
    %v571 = vpop.permute.xlu0 %570
    %vm572 = vcmp.eq.s32.totalorder %v507, %v571
    %v573 = vsel %vm572, %v342, 0.0
    %575 = vrot.lane.b32.xlu0 %v573, 112
    %v576 = vpop.permute.xlu0 %575
    %v578 = vadd.f32 %v573, %v576
    %579 = vrot.lane.b32.xlu0 %v573, 96
    %v580 = vpop.permute.xlu0 %579
    %v582 = vadd.f32 %v578, %v580
    %583 = vrot.lane.b32.xlu0 %v573, 80
    %v584 = vpop.permute.xlu0 %583
    %v586 = vadd.f32 %v582, %v584
    %587 = vrot.lane.b32.xlu0 %v573, 64
    %v588 = vpop.permute.xlu0 %587
    %v590 = vsel %vm529, %v588, 0.0
    %591 = vadd.xlane.f32.xlu0 %v590
    %v592 = vpop.xlane.xlu0 %591
    %594 = vrot.lane.b32.xlu0 %v586, 32
    %v595 = vpop.permute.xlu0 %594
    %vm597 = vcmask 392448
    %598 = vst.msk [vmem:[%s4] sm:$0xff] %vm597, %v595
    %vm599 = vcmask 23568
    %600 = vst.msk [vmem:[%s5] sm:$0xff] %vm599, %v592
    %601 = vset.pattern.permute.xlu0 3
    %602 = vperm.xlu0 %601, %v488
    %v603 = vpop.permute.xlu0 %602
    %vm604 = vcmp.eq.s32.totalorder %v507, %v603
    %v605 = vsel %vm604, %v344, 0.0
    %607 = vrot.lane.b32.xlu0 %v605, 112
    %v608 = vpop.permute.xlu0 %607
    %v610 = vadd.f32 %v605, %v608
    %611 = vrot.lane.b32.xlu0 %v605, 96
    %v612 = vpop.permute.xlu0 %611
    %v614 = vadd.f32 %v610, %v612
    %615 = vrot.lane.b32.xlu0 %v605, 80
    %v616 = vpop.permute.xlu0 %615
    %v618 = vadd.f32 %v614, %v616
    %619 = vrot.lane.b32.xlu0 %v605, 64
    %v620 = vpop.permute.xlu0 %619
    %v622 = vsel %vm529, %v620, 0.0
    %623 = vadd.xlane.f32.xlu0 %v622
    %v624 = vpop.xlane.xlu0 %623
    %626 = vrot.lane.b32.xlu0 %v618, 48
    %v627 = vpop.permute.xlu0 %626
    %vm629 = vcmask 523648
    %630 = vst.msk [vmem:[%s4] sm:$0xff] %vm629, %v627
    %vm631 = vcmask 31768
    %632 = vst.msk [vmem:[%s5] sm:$0xff] %vm631, %v624
    %633 = vset.pattern.permute.xlu0 4
    %634 = vperm.xlu0 %633, %v488
    %v635 = vpop.permute.xlu0 %634
    %vm636 = vcmp.eq.s32.totalorder %v507, %v635
    %v637 = vsel %vm636, %v413, 0.0
    %639 = vrot.lane.b32.xlu0 %v637, 112
    %v640 = vpop.permute.xlu0 %639
    %v642 = vadd.f32 %v637, %v640
    %643 = vrot.lane.b32.xlu0 %v637, 96
    %v644 = vpop.permute.xlu0 %643
    %v646 = vadd.f32 %v642, %v644
    %647 = vrot.lane.b32.xlu0 %v637, 80
    %v648 = vpop.permute.xlu0 %647
    %v650 = vadd.f32 %v646, %v648
    %651 = vrot.lane.b32.xlu0 %v637, 64
    %v652 = vpop.permute.xlu0 %651
    %v654 = vsel %vm529, %v652, 0.0
    %655 = vadd.xlane.f32.xlu0 %v654
    %v656 = vpop.xlane.xlu0 %655
    %658 = vrot.lane.b32.xlu0 %v650, 64
    %v659 = vpop.permute.xlu0 %658
    %vm661 = vcmask 654848
    %662 = vst.msk [vmem:[%s4] sm:$0xff] %vm661, %v659
    %vm663 = vcmask 39968
    %664 = vst.msk [vmem:[%s5] sm:$0xff] %vm663, %v656
    %665 = vset.pattern.permute.xlu0 5
    %666 = vperm.xlu0 %665, %v488
    %v667 = vpop.permute.xlu0 %666
    %vm668 = vcmp.eq.s32.totalorder %v507, %v667
    %v669 = vsel %vm668, %v415, 0.0
    %671 = vrot.lane.b32.xlu0 %v669, 112
    %v672 = vpop.permute.xlu0 %671
    %v674 = vadd.f32 %v669, %v672
    %675 = vrot.lane.b32.xlu0 %v669, 96
    %v676 = vpop.permute.xlu0 %675
    %v678 = vadd.f32 %v674, %v676
    %679 = vrot.lane.b32.xlu0 %v669, 80
    %v680 = vpop.permute.xlu0 %679
    %v682 = vadd.f32 %v678, %v680
    %683 = vrot.lane.b32.xlu0 %v669, 64
    %v684 = vpop.permute.xlu0 %683
    %v686 = vsel %vm529, %v684, 0.0
    %687 = vadd.xlane.f32.xlu0 %v686
    %v688 = vpop.xlane.xlu0 %687
    %690 = vrot.lane.b32.xlu0 %v682, 80
    %v691 = vpop.permute.xlu0 %690
    %vm693 = vcmask 786048
    %694 = vst.msk [vmem:[%s4] sm:$0xff] %vm693, %v691
    %vm695 = vcmask 48168
    %696 = vst.msk [vmem:[%s5] sm:$0xff] %vm695, %v688
    %697 = vset.pattern.permute.xlu0 6
    %698 = vperm.xlu0 %697, %v488
    %v699 = vpop.permute.xlu0 %698
    %vm700 = vcmp.eq.s32.totalorder %v507, %v699
    %v701 = vsel %vm700, %v484, 0.0
    %703 = vrot.lane.b32.xlu0 %v701, 112
    %v704 = vpop.permute.xlu0 %703
    %v706 = vadd.f32 %v701, %v704
    %707 = vrot.lane.b32.xlu0 %v701, 96
    %v708 = vpop.permute.xlu0 %707
    %v710 = vadd.f32 %v706, %v708
    %711 = vrot.lane.b32.xlu0 %v701, 80
    %v712 = vpop.permute.xlu0 %711
    %v714 = vadd.f32 %v710, %v712
    %715 = vrot.lane.b32.xlu0 %v701, 64
    %v716 = vpop.permute.xlu0 %715
    %v718 = vsel %vm529, %v716, 0.0
    %719 = vadd.xlane.f32.xlu0 %v718
    %v720 = vpop.xlane.xlu0 %719
    %722 = vrot.lane.b32.xlu0 %v714, 96
    %v723 = vpop.permute.xlu0 %722
    %vm725 = vcmask 917248
    %726 = vst.msk [vmem:[%s4] sm:$0xff] %vm725, %v723
    %vm727 = vcmask 56368
    %728 = vst.msk [vmem:[%s5] sm:$0xff] %vm727, %v720
    %729 = vset.pattern.permute.xlu0 7
    %730 = vperm.xlu0 %729, %v488
    %v731 = vpop.permute.xlu0 %730
    %vm732 = vcmp.eq.s32.totalorder %v507, %v731
    %v733 = vsel %vm732, %v486, 0.0
    %735 = vrot.lane.b32.xlu0 %v733, 112
    %v736 = vpop.permute.xlu0 %735
    %v738 = vadd.f32 %v733, %v736
    %739 = vrot.lane.b32.xlu0 %v733, 96
    %v740 = vpop.permute.xlu0 %739
    %v742 = vadd.f32 %v738, %v740
    %743 = vrot.lane.b32.xlu0 %v733, 80
    %v744 = vpop.permute.xlu0 %743
    %v746 = vadd.f32 %v742, %v744
    %747 = vrot.lane.b32.xlu0 %v733, 64
    %v748 = vpop.permute.xlu0 %747
    %v750 = vsel %vm529, %v748, 0.0
    %751 = vadd.xlane.f32.xlu0 %v750
    %v752 = vpop.xlane.xlu0 %751
    %754 = vrot.lane.b32.xlu0 %v746, 112
    %v755 = vpop.permute.xlu0 %754
    %vm757 = vcmask 1048448
    %758 = vst.msk [vmem:[%s4] sm:$0xff] %vm757, %v755
    %vm759 = vcmask 64568
    %760 = vst.msk [vmem:[%s5] sm:$0xff] %vm759, %v752
    // Predicated region
    $region22: #{action_dynamic_model_forward.1} parent=1 // pred_check
      _
    $region23: #{action_dynamic_model_forward.1} parent=1 // pred_check_branch
      %762 = sbr.rel (0) target = $region25
    $region24: #{action_dynamic_model_forward.1} parent=1 // pred_region
      _
    $region25: #{action_dynamic_model_forward.1} parent=1 // pred_fallthru
      _
    // Predicated region
    $region26: #{action_dynamic_model_forward.1} parent=1 // pred_check
      _
    $region27: #{action_dynamic_model_forward.1} parent=1 // pred_check_branch
      %764 = sbr.rel (0) target = $region29
    $region28: #{action_dynamic_model_forward.1} parent=1 // pred_region
      _
    $region29: #{action_dynamic_model_forward.1} parent=1 // pred_fallthru
      _
    // Predicated region
    $region30: #{action_dynamic_model_forward.1} parent=1 // pred_check
      _
    $region31: #{action_dynamic_model_forward.1} parent=1 // pred_check_branch
      %766 = sbr.rel (0) target = $region33
    $region32: #{action_dynamic_model_forward.1} parent=1 // pred_region
      _
    $region33: #{action_dynamic_model_forward.1} parent=1 // pred_fallthru
      _
    // Predicated region
    $region34: #{action_dynamic_model_forward.1} parent=1 // pred_check
      _
    $region35: #{action_dynamic_model_forward.1} parent=1 // pred_check_branch
      %768 = sbr.rel (0) target = $region37
    $region36: #{action_dynamic_model_forward.1} parent=1 // pred_region
      _
    $region37: #{action_dynamic_model_forward.1} parent=1 // pred_fallthru
      _
    %769 = vsyncpa [#allocation3], 1

</llo_original>
